<compile_context>
chip_gen: v6e
topology: v6e:2x2x1
jax: 0.10.0
libtpu: 0.0.40
codegen_flags: <defaults>
</compile_context>

<pallas_src>
import functools

import jax
import jax.numpy as jnp
from jax.experimental import pallas as pl
from jax.experimental.pallas import tpu as pltpu

_LANES = 128        # lane width of a vreg; last dim of the lane-dense slab
_BLOCK_ROWS = 512   # (512, 128) f32 block = 256 KiB, double-buffered by Pallas


# ----------------------------------------------------------------------------
# Single-step kernel (fallback path): state += 1 ; y = x + state
# Everything lives in SMEM — pure scalar-slot work, no padded vreg tile,
# no VMEM DMA, no masked 1-lane store.
# ----------------------------------------------------------------------------
def _stateful_kernel(state_ref, x_ref, y_ref, new_state_ref):
    # state_ref:     SMEM int32[1]   (aliased with new_state_ref's HBM buffer)
    # x_ref:         SMEM float32[1]
    # y_ref:         SMEM float32[1]
    # new_state_ref: SMEM int32[1]
    new_state = state_ref[0] + jnp.int32(1)
    new_state_ref[0] = new_state
    y_ref[0] = x_ref[0] + new_state.astype(y_ref.dtype)


@functools.partial(jax.jit, donate_argnums=(1,))
def module_stateful_forward(x, state):
    """One forward pass. Returns (y, new_state); `state` is donated/aliased."""
    y, new_state = pl.pallas_call(
        _stateful_kernel,
        out_shape=(
            jax.ShapeDtypeStruct(x.shape, x.dtype),          # y
            jax.ShapeDtypeStruct(state.shape, state.dtype),  # new_state
        ),
        in_specs=[
            pl.BlockSpec(memory_space=pltpu.SMEM),   # state
            pl.BlockSpec(memory_space=pltpu.SMEM),   # x
        ],
        out_specs=(
            pl.BlockSpec(memory_space=pltpu.SMEM),   # y
            pl.BlockSpec(memory_space=pltpu.SMEM),   # new_state
        ),
        # state (input 0) reuses the same HBM buffer as new_state (output 1).
        input_output_aliases={0: 1},
    )(state, x)
    return y, new_state


# ----------------------------------------------------------------------------
# Batched kernel (primary path): N sequential forward calls fused into one
# launch.  Output is a lane-dense (rows, 128) slab; element with flat index
# i (row*128 + lane, offset by the grid block) holds x + (state + i + 1).
# ----------------------------------------------------------------------------
def _stateful_batched_kernel(state_ref, x_ref, y_ref):
    br, lanes = y_ref.shape
    block_base = pl.program_id(0) * (br * lanes)
    # Hoist the scalar part once: x + state + 1 + block_base  (float32).
    base = x_ref[0] + (state_ref[0] + jnp.int32(1) + block_base).astype(jnp.float32)
    # Step offset within the block, generated directly in float32 along the
    # lane (fast) axis — no int32 array add / cast on the VPU.
    row = jax.lax.broadcasted_iota(jnp.float32, (br, lanes), 0)
    lane = jax.lax.broadcasted_iota(jnp.float32, (br, lanes), 1)
    y_ref[...] = base + row * jnp.float32(lanes) + lane


@functools.partial(jax.jit, static_argnums=(2,), donate_argnums=(1,))
def module_stateful_forward_n(x, state, num_steps):
    """num_steps sequential forward passes in a single pallas_call.

    Returns (y, new_state) with y.shape == (num_steps,) + x.shape.
    Assumes x.shape == (1,) as in the module spec (torch.ones(1)).
    """
    assert x.shape == (1,), "ModuleStateful spec uses x of shape (1,)"
    assert 0 < num_steps < 2**31 - 1

    rows = pl.cdiv(num_steps, _LANES)
    if rows <= _BLOCK_ROWS:
        # Single block == full array (exempt from the (8,128) divisibility rule).
        block_rows, rows_padded = rows, rows
    else:
        block_rows = _BLOCK_ROWS
        rows_padded = _BLOCK_ROWS * pl.cdiv(rows, _BLOCK_ROWS)
    grid = (rows_padded // block_rows,)

    y_dense = pl.pallas_call(
        _stateful_batched_kernel,
        out_shape=jax.ShapeDtypeStruct((rows_padded, _LANES), x.dtype),
        grid=grid,
        in_specs=[
            pl.BlockSpec(memory_space=pltpu.SMEM),   # state (scalar)
            pl.BlockSpec(memory_space=pltpu.SMEM),   # x     (scalar)
        ],
        # Lane-dense, gridded, pipelined writeback (unmasked vst, 256 KiB/block).
        out_specs=pl.BlockSpec((block_rows, _LANES), lambda i: (i, 0)),
        compiler_params=pltpu.CompilerParams(
            dimension_semantics=("parallel",),   # shards blocks across v7x's 2 TCs
        ),
    )(state, x)

    # Layout plumbing outside the kernel: drop lane padding, restore (N, 1).
    y = y_dense.reshape(-1)[:num_steps].reshape((num_steps,) + x.shape)
    # Counter update is a trivial fused scalar op; state buffer is donated.
    new_state = state + jnp.int32(num_steps)
    return y, new_state


# ----------------------------------------------------------------------------
# Thin wrapper carrying the int32 buffer across calls (mimics register_buffer)
# ----------------------------------------------------------------------------
class ModuleStatefulJax:
    def __init__(self):
        self.state = jnp.zeros((1,), dtype=jnp.int32)

    def __call__(self, x):
        """Single forward pass (fallback; dominated by per-call dispatch)."""
        y, new_state = module_stateful_forward(x, self.state)
        self.state = new_state
        return y

    def call_batched(self, x, num_steps):
        """Preferred path: `num_steps` forward calls fused into ONE launch."""
        ys, new_state = module_stateful_forward_n(x, self.state, num_steps)
        self.state = new_state
        return ys


if __name__ == "__main__":
    import warnings
    # Demo-only: if XLA declines the tiny int32[1] donation on some backend it
    # emits a (perf-signal, non-error) warning; keep demo stdout/stderr clean.
    warnings.filterwarnings("ignore", message="Some donated buffers were not usable")

    _ = jax.random.PRNGKey(0)  # deterministic inputs; module spec uses torch.ones(1)
    x = jnp.ones((1,), dtype=jnp.float32)

    # --- single-step path (SMEM-only scalar kernel, in-place state alias) ---
    mod = ModuleStatefulJax()
    y1 = mod(x)
    jax.block_until_ready(y1)
    y2 = mod(x)
    jax.block_until_ready(y2)
    assert jnp.allclose(y1, x + 1.0), (y1, x + 1.0)
    assert jnp.allclose(y2, x + 2.0), (y2, x + 2.0)
    assert int(mod.state[0]) == 2, mod.state

    # --- batched path, small: 4 calls in one launch (single (1,128) block) ---
    mod_b = ModuleStatefulJax()
    ys = mod_b.call_batched(x, 4)
    jax.block_until_ready(ys)
    expect = x[None, :] + jnp.arange(1, 5, dtype=jnp.float32)[:, None]
    assert ys.shape == (4, 1), ys.shape
    assert jnp.allclose(ys, expect), (ys, expect)
    assert int(mod_b.state[0]) == 4, mod_b.state

    # --- batched path, large enough to exercise the gridded (512,128) tiles ---
    mod_g = ModuleStatefulJax()
    n_big = 70_000  # rows=547 -> padded to 1024 -> grid of 2 blocks
    ys_big = mod_g.call_batched(x, n_big)
    jax.block_until_ready(ys_big)
    assert ys_big.shape == (n_big, 1), ys_big.shape
    expect_big = 1.0 + jnp.arange(1, n_big + 1, dtype=jnp.float32)
    assert jnp.allclose(ys_big[:, 0], expect_big), "batched gridded values mismatch"
    assert int(mod_g.state[0]) == n_big, mod_g.state

    print("KERNEL_OK")
</pallas_src>

<mosaic_0001>
module attributes {stable_mosaic.version = 11 : i64} {
  func.func @_stateful_kernel(%arg0: memref<1xi32, #tpu.memory_space<smem>>, %arg1: memref<1xf32, #tpu.memory_space<smem>>, %arg2: memref<1xf32, #tpu.memory_space<smem>>, %arg3: memref<1xi32, #tpu.memory_space<smem>>) attributes {dimension_semantics = [], scalar_prefetch = 0 : i64, scratch_operands = 0 : i64, tpu.core_type = #tpu.core_type<tc>} {
    %c0 = arith.constant 0 : index
    %0 = memref.load %arg0[%c0] : memref<1xi32, #tpu.memory_space<smem>>
    %c1_i32 = arith.constant 1 : i32
    %1 = arith.addi %0, %c1_i32 : i32
    %c0_0 = arith.constant 0 : index
    %2 = memref.load %arg3[%c0_0] : memref<1xi32, #tpu.memory_space<smem>>
    memref.store %1, %arg3[%c0_0] : memref<1xi32, #tpu.memory_space<smem>>
    %c0_1 = arith.constant 0 : index
    %3 = memref.load %arg1[%c0_1] : memref<1xf32, #tpu.memory_space<smem>>
    %4 = arith.sitofp %1 : i32 to f32
    %5 = arith.addf %3, %4 : f32
    %c0_2 = arith.constant 0 : index
    %6 = memref.load %arg2[%c0_2] : memref<1xf32, #tpu.memory_space<smem>>
    memref.store %5, %arg2[%c0_2] : memref<1xf32, #tpu.memory_space<smem>>
    return
  }
}

</mosaic_0001>

<llo_original>
// kernel: module_stateful_forward.1
$region0: #{module_stateful_forward.1}
  #allocation0 [shape = 'u32[]', space=smem, size = 0x4, offset = 0x4, fixed_abs, tag = 'smem constant byte address 0x4 - core index']
  #allocation1 [shape = 'u32[144,128]{1,0:T(1,128)}', space=vmem, size = 0x12000, scoped, tag = 'internal scratch']
  #allocation2 [shape = 's32[1]{0:T(128)S(6)}', space=smem, size = 0x200, scoped, tag = 'scoped memory for module_stateful_forward.1']
  #allocation3 [shape = 'f32[1]{0:T(128)S(6)}', space=smem, size = 0x200, scoped, tag = 'scoped memory for module_stateful_forward.1']
  %s0 = inlined_call_operand.<no memory space> [shape: s32[1], index: 0, kind: input, shape index: {}, may-alias: {0,3}]
  %s1 = inlined_call_operand.<no memory space> [shape: f32[1], index: 1, kind: input, shape index: {}]
  %s2 = inlined_call_operand.hbm [shape: f32[1], index: 2, kind: output, shape index: {0}]
  %s3 = inlined_call_operand.hbm [shape: s32[1], index: 3, kind: output, shape index: {1}, may-alias: {0,3}]
  %4 = xla_tuple %s2, %s3
  %s5 = sld [smem:[#allocation0]]
  $region26: #{module_stateful_forward.1} parent=0
    _
  %s7 = ssub.s32 1, %s5
  %s8 = scalar_select 0, %s7, %s5
  %9 = sst [smem:[#allocation2]] %s0
  %10 = sst [smem:[#allocation3]] %s1
  $region1: #{module_stateful_forward.1} parent=0
    #allocation4 [shape = 'u8[512]{0}', space=smem, size = 0x200, scoped, tag = 'output window, operand 0, single buffered']
    #allocation5 [shape = 's32[1]{0}', space=sflag, size = 0x4, scoped, tag = 'scoped memory for module_stateful_forward.1']
    #allocation6 [shape = 'u8[512]{0}', space=smem, size = 0x200, scoped, tag = 'output window, operand 1, single buffered']
    #allocation7 [shape = 's32[1]{0}', space=sflag, size = 0x4, scoped, tag = 'scoped memory for module_stateful_forward.1']
    %11 = vsyncpa [#allocation5], 0
    %12 = vsyncpa [#allocation7], 0
    // Predicated region
    $region2: #{module_stateful_forward.1} parent=1 // pred_check
      _
    $region3: #{module_stateful_forward.1} parent=1 // pred_check_branch
      %14 = sbr.rel (0) target = $region5
    $region4: #{module_stateful_forward.1} parent=1 // pred_region
      _
    $region5: #{module_stateful_forward.1} parent=1 // pred_fallthru
      _
    // Predicated region
    $region6: #{module_stateful_forward.1} parent=1 // pred_check
      _
    $region7: #{module_stateful_forward.1} parent=1 // pred_check_branch
      %16 = sbr.rel (0) target = $region9
    $region8: #{module_stateful_forward.1} parent=1 // pred_region
      _
    $region9: #{module_stateful_forward.1} parent=1 // pred_fallthru
      _
    %s17 = sld [smem:[#allocation2]]
    %s18 = sadd.s32 %s17, 1
    %s19 = scalar_lea.smem [#allocation6], 0
    %20 = sst [smem:[%s19]] %s18
    %s21 = sld [smem:[#allocation3]]
    %s22 = scvt.s32.f32 %s18
    %s23 = sadd.f32 %s21, %s22
    %s24 = scalar_lea.smem [#allocation4], 0
    %25 = sst [smem:[%s24]] %s23
    // Predicated region
    $region10: #{module_stateful_forward.1} parent=1 // pred_check
      _
    $region11: #{module_stateful_forward.1} parent=1 // pred_check_branch
      %27 = sbr.rel (0) target = $region13
    $region12: #{module_stateful_forward.1} parent=1 // pred_region
      %s29 = ssub.s32 16, 16
      %30 = vsyncadd [#allocation5], %s29
      %33 = dma.smem_to_hbm [#allocation4], 16, %s2, [#allocation5]
    $region13: #{module_stateful_forward.1} parent=1 // pred_fallthru
      _
    // Predicated region
    $region14: #{module_stateful_forward.1} parent=1 // pred_check
      _
    $region15: #{module_stateful_forward.1} parent=1 // pred_check_branch
      %35 = sbr.rel (0) target = $region17
    $region16: #{module_stateful_forward.1} parent=1 // pred_region
      %s37 = ssub.s32 16, 16
      %38 = vsyncadd [#allocation7], %s37
      %41 = dma.smem_to_hbm [#allocation6], 16, %s3, [#allocation7]
    $region17: #{module_stateful_forward.1} parent=1 // pred_fallthru
      _
    // Predicated region
    $region18: #{module_stateful_forward.1} parent=1 // pred_check
      _
    $region19: #{module_stateful_forward.1} parent=1 // pred_check_branch
      %43 = sbr.rel (0) target = $region21
    $region20: #{module_stateful_forward.1} parent=1 // pred_region
      %44 = dma.done [#allocation5], 16
    $region21: #{module_stateful_forward.1} parent=1 // pred_fallthru
      _
    // Predicated region
    $region22: #{module_stateful_forward.1} parent=1 // pred_check
      _
    $region23: #{module_stateful_forward.1} parent=1 // pred_check_branch
      %46 = sbr.rel (0) target = $region25
    $region24: #{module_stateful_forward.1} parent=1 // pred_region
      %47 = dma.done [#allocation7], 16
    $region25: #{module_stateful_forward.1} parent=1 // pred_fallthru
      _
    %48 = sfence
    %49 = vsyncpa [#allocation5], 1
    %50 = vsyncpa [#allocation7], 1

</llo_original>
